<compile_context>
chip_gen: v7x
topology: tpu7x:2x2x1
jax: 0.10.0
libtpu: 0.0.40
codegen_flags: <defaults>
</compile_context>

<pallas_src>
import functools

import jax
import jax.numpy as jnp
from jax.experimental import pallas as pl
from jax.experimental.pallas import tpu as pltpu


def _round_up(x, m):
    return (x + m - 1) // m * m


# ---------------------------------------------------------------------------
# Kernel 1: projection  xw = X @ W^T, with a "ones" column at deg_col so the
# aggregation matmul also produces the in-degree.
# ---------------------------------------------------------------------------
def _project_kernel(x_ref, wt_ref, xw_ref, *, deg_col):
    xw = jnp.dot(x_ref[...], wt_ref[...], preferred_element_type=jnp.float32)
    lane = jax.lax.broadcasted_iota(jnp.int32, xw.shape, 1)
    xw_ref[...] = jnp.where(lane == deg_col, 1.0, xw).astype(xw_ref.dtype)


# ---------------------------------------------------------------------------
# Kernel 2: mean aggregation + bias
#   grid = (n_dst_tiles, n_src_tiles)   -- src (reduction) axis last
#   The output block itself is the f32 accumulator (block index constant in k).
#   Degree lives in output column `deg_col` (thanks to the ones column of xw).
# ---------------------------------------------------------------------------
def _aggregate_kernel(adj_ref, xw_ref, b_ref, o_ref, *, tk, deg_col,
                      xw_resident, compute_dtype):
    k = pl.program_id(1)

    @pl.when(k == 0)
    def _init():
        o_ref[...] = jnp.zeros_like(o_ref)

    adj = adj_ref[...].astype(compute_dtype)          # bf16 0/1 -> exact
    if xw_resident:
        start = pl.multiple_of(k * tk, tk)
        xw = xw_ref[pl.ds(start, tk), :]               # slice of resident xw
    else:
        xw = xw_ref[...]                               # pipelined (tk, F) tile
    o_ref[...] += jnp.dot(adj, xw.astype(compute_dtype),
                          preferred_element_type=jnp.float32)   # MXU

    @pl.when(k == pl.num_programs(1) - 1)
    def _finalize():
        deg = o_ref[:, deg_col:deg_col + 1]
        # nodes with no in-edges -> h = 0 (DGL mean-reduce semantics)
        inv = jnp.where(deg > 0.0, 1.0 / jnp.maximum(deg, 1.0), 0.0)
        o_ref[...] = o_ref[...] * inv + b_ref[...]


# ---------------------------------------------------------------------------
# Wrapper
# ---------------------------------------------------------------------------
@functools.partial(jax.jit, static_argnames=("tm", "tk", "compute_dtype"))
def gcn_only_nfeat_mean_msg(adj, feature, weight, bias, *,
                            tm=1024, tk=1024, compute_dtype="float32"):
    """adj: (N, N) with adj[v, u] = 1 iff edge u->v (0/1 entries); feature:
    (N, Fin); weight: (Fout, Fin); bias: (Fout,).  Returns (N, Fout) f32."""
    n, fin = feature.shape
    fout = weight.shape[0]
    cdt = jnp.bfloat16 if compute_dtype == "bfloat16" else jnp.float32

    # Degree rides in an extra (otherwise zero-padded) lane-dense xw column.
    deg_col = fout
    fout_pad = _round_up(fout + 1, 128)

    # Tile selection: >=1024 default, clamp so mid-size graphs keep >=2 dst
    # tiles (v7x megacore), and full-dim blocks for small graphs.
    tm = min(tm, _round_up(-(-n // 2), 8))   # >= 2 dst tiles when n is mid-size
    tm = min(tm, _round_up(n, 8))
    tk = min(tk, _round_up(n, 128))
    n_dst = _round_up(n, tm)
    n_src = _round_up(n, tk)

    # Adjacency staging: skip the pad/cast copy entirely when adj is already
    # bf16 and tile-aligned (pre-staged adjacency); otherwise pad with zeros
    # (padded src cols contribute nothing; padded dst rows are sliced off).
    if adj.dtype == jnp.bfloat16 and n_dst == n and n_src == n:
        adj_p = adj
    else:
        adj_p = jnp.zeros((n_dst, n_src), jnp.bfloat16).at[:n, :n].set(
            adj.astype(jnp.bfloat16))

    x_p = jnp.zeros((n_src, fin), jnp.float32).at[:n, :].set(
        feature.astype(jnp.float32))
    wt_p = jnp.zeros((fin, fout_pad), jnp.float32).at[:, :fout].set(
        weight.T.astype(jnp.float32))
    b_p = jnp.zeros((1, fout_pad), jnp.float32).at[0, :fout].set(
        bias.astype(jnp.float32))

    # ---- projection: xw = X @ W^T (+ ones column)  -> (n_src, fout_pad) ----
    xw = pl.pallas_call(
        functools.partial(_project_kernel, deg_col=deg_col),
        out_shape=jax.ShapeDtypeStruct((n_src, fout_pad), jnp.float32),
        grid=(n_src // tk,),
        in_specs=[
            pl.BlockSpec((tk, fin), lambda i: (i, 0)),
            pl.BlockSpec((fin, fout_pad), lambda i: (0, 0)),
        ],
        out_specs=pl.BlockSpec((tk, fout_pad), lambda i: (i, 0)),
        compiler_params=pltpu.CompilerParams(
            dimension_semantics=("parallel",)),
    )(x_p, wt_p)

    # ---- mean aggregation over in-neighbors + bias ----
    xw_bytes = n_src * fout_pad * 4
    xw_resident = xw_bytes <= (16 << 20)     # keep v7x (64 MiB/TC) safe
    if xw_resident:
        xw_spec = pl.BlockSpec((n_src, fout_pad), lambda i, k: (0, 0))
    else:
        xw_spec = pl.BlockSpec((tk, fout_pad), lambda i, k: (k, 0))

    cdt_bytes = 2 if cdt == jnp.bfloat16 else 4
    vmem_est = (2 * tm * tk * 2                      # adj double buffer (bf16)
                + tm * tk * cdt_bytes                # in-kernel upcast temp
                + 2 * tm * fout_pad * 4              # resident output/accum
                + (xw_bytes if xw_resident else 2 * tk * fout_pad * 4)
                + 2 * fout_pad * 4)                  # bias
    vmem_limit = min(max(int(vmem_est * 1.5), 32 << 20), 56 << 20)

    out_p = pl.pallas_call(
        functools.partial(_aggregate_kernel, tk=tk, deg_col=deg_col,
                          xw_resident=xw_resident, compute_dtype=cdt),
        out_shape=jax.ShapeDtypeStruct((n_dst, fout_pad), jnp.float32),
        grid=(n_dst // tm, n_src // tk),
        in_specs=[
            pl.BlockSpec((tm, tk), lambda i, k: (i, k)),      # adj tile
            xw_spec,                                          # xw (resident/tiled)
            pl.BlockSpec((1, fout_pad), lambda i, k: (0, 0)), # bias
        ],
        out_specs=pl.BlockSpec((tm, fout_pad), lambda i, k: (i, 0)),
        compiler_params=pltpu.CompilerParams(
            dimension_semantics=("parallel", "arbitrary"),
            vmem_limit_bytes=vmem_limit),
    )(adj_p, xw, b_p)

    return out_p[:n, :fout]


# ---------------------------------------------------------------------------
# Pure-JAX reference (matches the PyTorch module)
# ---------------------------------------------------------------------------
def _reference(adj, feature, weight, bias):
    deg = jnp.sum(adj, axis=-1, keepdims=True)
    agg = adj @ feature
    h = jnp.where(deg > 0, agg / jnp.where(deg > 0, deg, 1.0), 0.0)
    return h @ weight.T + bias[None, :]


if __name__ == "__main__":
    key = jax.random.PRNGKey(0)

    IN_FEATS = 32
    OUT_FEATS = 16
    bound = 1.0 / (IN_FEATS ** 0.5)

    def make_case(seed, N, adj_dtype):
        k_adj, k_feat, k_w, k_b = jax.random.split(jax.random.fold_in(key, seed), 4)
        adj = (jax.random.uniform(k_adj, (N, N)) < 0.3).astype(adj_dtype)
        feature = jax.random.normal(k_feat, (N, IN_FEATS), dtype=jnp.float32)
        weight = jax.random.uniform(k_w, (OUT_FEATS, IN_FEATS),
                                    minval=-bound, maxval=bound,
                                    dtype=jnp.float32)
        bias = jax.random.uniform(k_b, (OUT_FEATS,),
                                  minval=-bound, maxval=bound,
                                  dtype=jnp.float32)
        return adj, feature, weight, bias

    # (seed, N, adj storage dtype, compute dtype, tolerance)
    cases = [
        (0, 8,    jnp.float32,  "float32",  1e-4),   # tiny single-tile
        (1, 640,  jnp.float32,  "float32",  1e-4),   # multi dst-tile
        (2, 1024, jnp.bfloat16, "float32",  1e-4),   # pre-staged bf16 adj fast path
        (3, 640,  jnp.bfloat16, "bfloat16", 3e-2),   # bf16 single-pass MXU (v5e path)
    ]
    for seed, N, adj_dtype, cdtype, tol in cases:
        adj, feature, weight, bias = make_case(seed, N, adj_dtype)
        out = gcn_only_nfeat_mean_msg(adj, feature, weight, bias,
                                      compute_dtype=cdtype)
        out = jax.block_until_ready(out)
        ref = _reference(adj.astype(jnp.float32), feature, weight, bias)
        assert out.shape == (N, OUT_FEATS)
        err = jnp.max(jnp.abs(out - ref))
        assert jnp.allclose(out, ref, atol=tol, rtol=tol), (
            f"mismatch at N={N} ({cdtype}): max abs err {err}")

    print("KERNEL_OK")
</pallas_src>

<mosaic_0001>
module attributes {stable_mosaic.version = 11 : i64} {
  func.func @_project_kernel(%arg0: i32, %arg1: memref<128x32xf32, #tpu.memory_space<vmem>>, %arg2: memref<32x128xf32, #tpu.memory_space<vmem>>, %arg3: memref<128x128xf32, #tpu.memory_space<vmem>>) attributes {dimension_semantics = [#tpu.dimension_semantics<parallel>], iteration_bounds = array<i64: 1>, scalar_prefetch = 0 : i64, scratch_operands = 0 : i64, tpu.core_type = #tpu.core_type<tc>, window_params = [{transform_indices = @transform_0, window_bounds = array<i64: 128, 32>}, {pipeline_mode = #tpu.pipeline_mode<synchronous>, transform_indices = @transform_1, window_bounds = array<i64: 32, 128>}, {transform_indices = @transform_2, window_bounds = array<i64: 128, 128>}]} {
    %c0 = arith.constant 0 : index
    %c0_0 = arith.constant 0 : index
    %0 = vector.load %arg1[%c0, %c0_0] : memref<128x32xf32, #tpu.memory_space<vmem>>, vector<128x32xf32>
    %c0_1 = arith.constant 0 : index
    %c0_2 = arith.constant 0 : index
    %1 = vector.load %arg2[%c0_1, %c0_2] : memref<32x128xf32, #tpu.memory_space<vmem>>, vector<32x128xf32>
    %cst = arith.constant dense<0.000000e+00> : vector<128x128xf32>
    %2 = tpu.matmul %0, %1, %cst {dimension_numbers = #tpu.dot_dimension_numbers<[1], [0], [0], [1], [0, 0, 1, 1], [], []>} : vector<128x32xf32>, vector<32x128xf32>, vector<128x128xf32> -> vector<128x128xf32>
    %3 = tpu.iota {dimensions = array<i32: 1>} : vector<128x128xi32>
    %c16_i32 = arith.constant 16 : i32
    %4 = vector.broadcast %c16_i32 : i32 to vector<128x128xi32>
    %5 = arith.cmpi eq, %3, %4 : vector<128x128xi32>
    %cst_3 = arith.constant 1.000000e+00 : f32
    %6 = vector.broadcast %cst_3 : f32 to vector<128x128xf32>
    %7 = arith.select %5, %6, %2 : vector<128x128xi1>, vector<128x128xf32>
    %c0_4 = arith.constant 0 : index
    %c0_5 = arith.constant 0 : index
    %8 = vector.load %arg3[%c0_4, %c0_5] : memref<128x128xf32, #tpu.memory_space<vmem>>, vector<128x128xf32>
    tpu.vector_store %arg3[%c0_4, %c0_5], %7 {strides = array<i32>} : memref<128x128xf32, #tpu.memory_space<vmem>>, vector<128x128xf32>,
    return
  }
  func.func @transform_0(%arg0: i32) -> (i32, i32) {
    %c0_i32 = arith.constant 0 : i32
    %c0_i32_0 = arith.constant 0 : i32
    return %arg0, %c0_i32 : i32, i32
  }
  func.func @transform_1(%arg0: i32) -> (i32, i32) {
    %c0_i32 = arith.constant 0 : i32
    %c0_i32_0 = arith.constant 0 : i32
    %c0_i32_1 = arith.constant 0 : i32
    return %c0_i32, %c0_i32_0 : i32, i32
  }
  func.func @transform_2(%arg0: i32) -> (i32, i32) {
    %c0_i32 = arith.constant 0 : i32
    %c0_i32_0 = arith.constant 0 : i32
    return %arg0, %c0_i32 : i32, i32
  }
}

module attributes {stable_mosaic.version = 11 : i64} {
  func.func @_aggregate_kernel(%arg0: i32, %arg1: i32, %arg2: memref<8x128xbf16, #tpu.memory_space<vmem>>, %arg3: memref<128x128xf32, #tpu.memory_space<vmem>>, %arg4: memref<1x128xf32, #tpu.memory_space<vmem>>, %arg5: memref<8x128xf32, #tpu.memory_space<vmem>>) attributes {dimension_semantics = [#tpu.dimension_semantics<parallel>, #tpu.dimension_semantics<arbitrary>], iteration_bounds = array<i64: 1, 1>, scalar_prefetch = 0 : i64, scratch_operands = 0 : i64, tpu.core_type = #tpu.core_type<tc>, window_params = [{transform_indices = @transform_0, window_bounds = array<i64: 8, 128>}, {pipeline_mode = #tpu.pipeline_mode<synchronous>, transform_indices = @transform_1, window_bounds = array<i64: 128, 128>}, {pipeline_mode = #tpu.pipeline_mode<synchronous>, transform_indices = @transform_2, window_bounds = array<i64: 1, 128>}, {transform_indices = @transform_3, window_bounds = array<i64: 8, 128>}]} {
    %c0_i32 = arith.constant 0 : i32
    %0 = arith.cmpi eq, %arg1, %c0_i32 : i32
    %1 = arith.extui %0 : i1 to i32
    %c0_i32_0 = arith.constant 0 : i32
    %2 = arith.cmpi ne, %1, %c0_i32_0 : i32
    scf.if %2 {
      %cst_9 = arith.constant 0.000000e+00 : f32
      %16 = vector.broadcast %cst_9 : f32 to vector<8x128xf32>
      %c0_10 = arith.constant 0 : index
      %c0_11 = arith.constant 0 : index
      %17 = vector.load %arg5[%c0_10, %c0_11] : memref<8x128xf32, #tpu.memory_space<vmem>>, vector<8x128xf32>
      tpu.vector_store %arg5[%c0_10, %c0_11], %16 {strides = array<i32>} : memref<8x128xf32, #tpu.memory_space<vmem>>, vector<8x128xf32>,
    } else {
    }
    %c0 = arith.constant 0 : index
    %c0_1 = arith.constant 0 : index
    %3 = vector.load %arg2[%c0, %c0_1] : memref<8x128xbf16, #tpu.memory_space<vmem>>, vector<8x128xbf16>
    %4 = arith.extf %3 : vector<8x128xbf16> to vector<8x128xf32>
    %c128_i32 = arith.constant 128 : i32
    %5 = arith.muli %arg1, %c128_i32 : i32
    %6 = tpu.assume_multiple %5, 128 : i32
    %7 = arith.index_cast %6 : i32 to index
    %c0_2 = arith.constant 0 : index
    %8 = vector.load %arg3[%7, %c0_2] : memref<128x128xf32, #tpu.memory_space<vmem>>, vector<128x128xf32>
    %c0_3 = arith.constant 0 : index
    %c0_4 = arith.constant 0 : index
    %9 = vector.load %arg5[%c0_3, %c0_4] : memref<8x128xf32, #tpu.memory_space<vmem>>, vector<8x128xf32>
    %cst = arith.constant dense<0.000000e+00> : vector<8x128xf32>
    %10 = tpu.matmul %4, %8, %cst {dimension_numbers = #tpu.dot_dimension_numbers<[1], [0], [0], [1], [0, 0, 1, 1], [], []>} : vector<8x128xf32>, vector<128x128xf32>, vector<8x128xf32> -> vector<8x128xf32>
    %11 = arith.addf %9, %10 : vector<8x128xf32>
    %c0_5 = arith.constant 0 : index
    %c0_6 = arith.constant 0 : index
    %12 = vector.load %arg5[%c0_5, %c0_6] : memref<8x128xf32, #tpu.memory_space<vmem>>, vector<8x128xf32>
    tpu.vector_store %arg5[%c0_5, %c0_6], %11 {strides = array<i32>} : memref<8x128xf32, #tpu.memory_space<vmem>>, vector<8x128xf32>,
    %c0_i32_7 = arith.constant 0 : i32
    %13 = arith.cmpi eq, %arg1, %c0_i32_7 : i32
    %14 = arith.extui %13 : i1 to i32
    %c0_i32_8 = arith.constant 0 : i32
    %15 = arith.cmpi ne, %14, %c0_i32_8 : i32
    scf.if %15 {
      %c0_9 = arith.constant 0 : index
      %c16 = arith.constant 16 : index
      %16 = vector.load %arg5[%c0_9, %c16] : memref<8x128xf32, #tpu.memory_space<vmem>>, vector<8x1xf32>
      %cst_10 = arith.constant 0.000000e+00 : f32
      %17 = vector.broadcast %cst_10 : f32 to vector<8x1xf32>
      %18 = arith.cmpf ogt, %16, %17 : vector<8x1xf32>
      %cst_11 = arith.constant 1.000000e+00 : f32
      %19 = vector.broadcast %cst_11 : f32 to vector<8x1xf32>
      %20 = arith.maximumf %16, %19 : vector<8x1xf32>
      %cst_12 = arith.constant 1.000000e+00 : f32
      %21 = vector.broadcast %cst_12 : f32 to vector<8x1xf32>
      %22 = arith.divf %21, %20 : vector<8x1xf32>
      %cst_13 = arith.constant 0.000000e+00 : f32
      %23 = vector.broadcast %cst_13 : f32 to vector<8x1xf32>
      %24 = arith.select %18, %22, %23 : vector<8x1xi1>, vector<8x1xf32>
      %c0_14 = arith.constant 0 : index
      %c0_15 = arith.constant 0 : index
      %25 = vector.load %arg5[%c0_14, %c0_15] : memref<8x128xf32, #tpu.memory_space<vmem>>, vector<8x128xf32>
      %26 = vector.broadcast %24 : vector<8x1xf32> to vector<8x128xf32>
      %27 = arith.mulf %25, %26 : vector<8x128xf32>
      %c0_16 = arith.constant 0 : index
      %c0_17 = arith.constant 0 : index
      %28 = vector.load %arg4[%c0_16, %c0_17] : memref<1x128xf32, #tpu.memory_space<vmem>>, vector<1x128xf32>
      %29 = vector.broadcast %28 : vector<1x128xf32> to vector<8x128xf32>
      %30 = arith.addf %27, %29 : vector<8x128xf32>
      %c0_18 = arith.constant 0 : index
      %c0_19 = arith.constant 0 : index
      %31 = vector.load %arg5[%c0_18, %c0_19] : memref<8x128xf32, #tpu.memory_space<vmem>>, vector<8x128xf32>
      tpu.vector_store %arg5[%c0_18, %c0_19], %30 {strides = array<i32>} : memref<8x128xf32, #tpu.memory_space<vmem>>, vector<8x128xf32>,
    } else {
    }
    return
  }
  func.func @transform_0(%arg0: i32, %arg1: i32) -> (i32, i32) {
    %c0_i32 = arith.constant 0 : i32
    return %arg0, %arg1 : i32, i32
  }
  func.func @transform_1(%arg0: i32, %arg1: i32) -> (i32, i32) {
    %c0_i32 = arith.constant 0 : i32
    %c0_i32_0 = arith.constant 0 : i32
    %c0_i32_1 = arith.constant 0 : i32
    return %c0_i32, %c0_i32_0 : i32, i32
  }
  func.func @transform_2(%arg0: i32, %arg1: i32) -> (i32, i32) {
    %c0_i32 = arith.constant 0 : i32
    %c0_i32_0 = arith.constant 0 : i32
    %c0_i32_1 = arith.constant 0 : i32
    return %c0_i32, %c0_i32_0 : i32, i32
  }
  func.func @transform_3(%arg0: i32, %arg1: i32) -> (i32, i32) {
    %c0_i32 = arith.constant 0 : i32
    %c0_i32_0 = arith.constant 0 : i32
    return %arg0, %c0_i32 : i32, i32
  }
}

</mosaic_0001>

<llo_original>
// kernel: gcn_only_nfeat_mean_msg.3
$region0: #{gcn_only_nfeat_mean_msg.3}
  #allocation0 [shape = 'u32[]', space=smem, size = 0x4, offset = 0x4, fixed_abs, tag = 'smem constant byte address 0x4 - core index']
  #allocation1 [shape = 'u32[144,128]{1,0:T(1,128)}', space=vmem, size = 0x12000, scoped, tag = 'internal scratch']
  %s0 = inlined_call_operand.vmem [shape: bf16[8,128], index: 0, kind: input, shape index: {}]
  %s1 = inlined_call_operand.vmem [shape: f32[128,128], index: 1, kind: input, shape index: {}]
  %s2 = inlined_call_operand.vmem [shape: f32[1,128], index: 2, kind: input, shape index: {}]
  %s3 = inlined_call_operand.hbm [shape: f32[8,128], index: 3, kind: output, shape index: {}]
  %s4 = sld [smem:[#allocation0]]
  $region30: #{gcn_only_nfeat_mean_msg.3} parent=0
    _
  %s6 = ssub.s32 1, %s4
  %s7 = scalar_select 0, %s6, %s4
  $region1: #{gcn_only_nfeat_mean_msg.3} parent=0
    #allocation2 [shape = 'u8[4096]{0}', space=vmem, size = 0x1000, scoped, tag = 'output window, operand 0, single buffered']
    #allocation3 [shape = 's32[1]{0}', space=sflag, size = 0x4, scoped, tag = 'scoped memory for gcn_only_nfeat_mean_msg.3']
    %8 = vsyncpa [#allocation3], 0
    // Predicated region
    $region2: #{gcn_only_nfeat_mean_msg.3} parent=1 // pred_check
      _
    $region3: #{gcn_only_nfeat_mean_msg.3} parent=1 // pred_check_branch
      %10 = sbr.rel (0) target = $region5
    $region4: #{gcn_only_nfeat_mean_msg.3} parent=1 // pred_region
      _
    $region5: #{gcn_only_nfeat_mean_msg.3} parent=1 // pred_fallthru
      _
    // Predicated region
    $region6: #{gcn_only_nfeat_mean_msg.3} parent=1 // pred_check
      _
    $region7: #{gcn_only_nfeat_mean_msg.3} parent=1 // pred_check_branch
      %12 = sbr.rel (0) target = $region9
    $region8: #{gcn_only_nfeat_mean_msg.3} parent=1 // pred_region
      _
    $region9: #{gcn_only_nfeat_mean_msg.3} parent=1 // pred_fallthru
      _
    // Predicated region
    $region10: #{gcn_only_nfeat_mean_msg.3} parent=1 // pred_check
      _
    $region11: #{gcn_only_nfeat_mean_msg.3} parent=1 // pred_check_branch
      %14 = sbr.rel (0) target = $region13
    $region12: #{gcn_only_nfeat_mean_msg.3} parent=1 // pred_region
      _
    $region13: #{gcn_only_nfeat_mean_msg.3} parent=1 // pred_fallthru
      _
    %p15 = scmp.eq.s32.totalorder 0, 0
    // Predicated region
    $region14: #{gcn_only_nfeat_mean_msg.3} parent=1 // pred_check
      %p16 = pneg %p15
    $region15: #{gcn_only_nfeat_mean_msg.3} parent=1 // pred_check_branch
      %18 = sbr.rel (%p16) target = $region17
    $region16: #{gcn_only_nfeat_mean_msg.3} parent=1 // pred_region
      %19 = vst [vmem:[#allocation2] sm:$0xff] 0.0
    $region17: #{gcn_only_nfeat_mean_msg.3} parent=1 // pred_fallthru
      _
    %v20 = vld [vmem:[%s0] sm:$0xf]
    %v21 = vunpack.c.l.bf16 %v20
    %s22 = smul.u32 0, 128
    %s23 = scalar_lea.vmem %s1, %s22
    %v24 = vld [vmem:[%s23] sm:$0xff]
    %v25 = vld [vmem:[%s23 + $0x8] sm:$0xff]
    %v26 = vld [vmem:[%s23 + $0x10] sm:$0xff]
    %v27 = vld [vmem:[%s23 + $0x18] sm:$0xff]
    %v28 = vld [vmem:[%s23 + $0x20] sm:$0xff]
    %v29 = vld [vmem:[%s23 + $0x28] sm:$0xff]
    %v30 = vld [vmem:[%s23 + $0x30] sm:$0xff]
    %v31 = vld [vmem:[%s23 + $0x38] sm:$0xff]
    %v32 = vld [vmem:[%s23 + $0x40] sm:$0xff]
    %v33 = vld [vmem:[%s23 + $0x48] sm:$0xff]
    %v34 = vld [vmem:[%s23 + $0x50] sm:$0xff]
    %v35 = vld [vmem:[%s23 + $0x58] sm:$0xff]
    %v36 = vld [vmem:[%s23 + $0x60] sm:$0xff]
    %v37 = vld [vmem:[%s23 + $0x68] sm:$0xff]
    %v38 = vld [vmem:[%s23 + $0x70] sm:$0xff]
    %v39 = vld [vmem:[%s23 + $0x78] sm:$0xff]
    %v40 = vld [vmem:[#allocation2] sm:$0xff]
    %41 = vmatprep.subr.mxu0 0.0
    %42 = vmatpush1.msra.mxu0 %v24
    %43 = vmatprep.subr.mxu0 0.0
    %44 = vmatpush1.msra.mxu0 %v25
    %45 = vmatprep.subr.mxu0 0.0
    %46 = vmatpush1.msra.mxu0 %v26
    %47 = vmatprep.subr.mxu0 0.0
    %48 = vmatpush1.msra.mxu0 %v27
    %49 = vmatprep.subr.mxu0 0.0
    %50 = vmatpush1.msra.mxu0 %v28
    %51 = vmatprep.subr.mxu0 0.0
    %52 = vmatpush1.msra.mxu0 %v29
    %53 = vmatprep.subr.mxu0 0.0
    %54 = vmatpush1.msra.mxu0 %v30
    %55 = vmatprep.subr.mxu0 0.0
    %56 = vmatpush1.msra.mxu0 %v31
    %57 = vmatprep.subr.mxu0 0.0
    %58 = vmatpush1.msra.mxu0 %v32
    %59 = vmatprep.subr.mxu0 0.0
    %60 = vmatpush1.msra.mxu0 %v33
    %61 = vmatprep.subr.mxu0 0.0
    %62 = vmatpush1.msra.mxu0 %v34
    %63 = vmatprep.subr.mxu0 0.0
    %64 = vmatpush1.msra.mxu0 %v35
    %65 = vmatprep.subr.mxu0 0.0
    %66 = vmatpush1.msra.mxu0 %v36
    %67 = vmatprep.subr.mxu0 0.0
    %68 = vmatpush1.msra.mxu0 %v37
    %69 = vmatprep.subr.mxu0 0.0
    %70 = vmatpush1.msra.mxu0 %v38
    %71 = vmatprep.subr.mxu0 0.0
    %72 = vmatpush1.msra.mxu0 %v39
    %73 = vmatprep.subr.mxu0 0.0
    %74 = vmatpush1.msra.mxu0 0.0
    %75 = vmatprep.subr.mxu0 0.0
    %76 = vmatpush1.msra.mxu0 0.0
    %77 = vmatprep.subr.mxu0 0.0
    %78 = vmatpush1.msra.mxu0 0.0
    %79 = vmatprep.subr.mxu0 0.0
    %80 = vmatpush1.msra.mxu0 0.0
    %81 = vmatprep.subr.mxu0 0.0
    %82 = vmatpush1.msra.mxu0 0.0
    %83 = vmatprep.subr.mxu0 0.0
    %84 = vmatpush1.msra.mxu0 0.0
    %85 = vmatprep.subr.mxu0 0.0
    %86 = vmatpush1.msra.mxu0 0.0
    %87 = vmatprep.subr.mxu0 0.0
    %88 = vmatpush1.msra.mxu0 0.0
    %89 = vmatprep.subr.mxu0 0.0
    %90 = vmatpush1.msra.mxu0 0.0
    %91 = vmatprep.subr.mxu0 0.0
    %92 = vmatpush1.msra.mxu0 0.0
    %93 = vmatprep.subr.mxu0 0.0
    %94 = vmatpush1.msra.mxu0 0.0
    %95 = vmatprep.subr.mxu0 0.0
    %96 = vmatpush1.msra.mxu0 0.0
    %97 = vmatprep.subr.mxu0 0.0
    %98 = vmatpush1.msra.mxu0 0.0
    %99 = vmatprep.subr.mxu0 0.0
    %100 = vmatpush1.msra.mxu0 0.0
    %101 = vmatprep.subr.mxu0 0.0
    %102 = vmatpush1.msra.mxu0 0.0
    %103 = vmatprep.subr.mxu0 0.0
    %104 = vmatpush1.msra.mxu0 0.0
    %105 = vmatprep.mubr.f32.mxu0 0.0
    %106 = vmatmul.mubr.f32.gmra.mrb[0].mxu0 %v21
    %v107 = vpop.f32.mrb[0].mxu0
    %v108 = vadd.f32 0.0, %v107
    %v109 = vpop.f32.mrb[0].mxu0
    %110 = vdwg.mxu0
    %v111 = vadd.f32 %v40, %v108
    %112 = vst [vmem:[#allocation2] sm:$0xff] %v111
    // Predicated region
    $region18: #{gcn_only_nfeat_mean_msg.3} parent=1 // pred_check
      %p113 = pneg %p15
    $region19: #{gcn_only_nfeat_mean_msg.3} parent=1 // pred_check_branch
      %115 = sbr.rel (%p113) target = $region21
    $region20: #{gcn_only_nfeat_mean_msg.3} parent=1 // pred_region
      %v116 = vld [vmem:[#allocation2] sm:$0xff]
      %vm117 = vcmp.gt.f32.partialorder %v116, 0.0
      %v118 = vmax.f32 %v116, 1.0
      %v119 = vrcp.pop %v118
      %v120 = vmul.f32 1.0, %v119
      %v121 = vsel %vm117, %v120, 0.0
      %123 = vset.pattern.permute.xlu0 16
      %124 = vperm.xlu0 %123, %v121
      %v125 = vpop.permute.xlu0 %124
      %v127 = vmul.f32 %v116, %v125
      %v128 = vld [vmem:[%s2] sm:$0x1]
      %v130 = vlaneseq
      %v131 = vshrl.u32 %v130, 7
      %v132 = vsub.s32 0, %v131
      %v133 = vrot.slane %v128, %v132
      %v135 = vadd.f32 %v127, %v133
      %136 = vst [vmem:[#allocation2] sm:$0xff] %v135
    $region21: #{gcn_only_nfeat_mean_msg.3} parent=1 // pred_fallthru
      _
    // Predicated region
    $region22: #{gcn_only_nfeat_mean_msg.3} parent=1 // pred_check
      _
    $region23: #{gcn_only_nfeat_mean_msg.3} parent=1 // pred_check_branch
      %138 = sbr.rel (0) target = $region25
    $region24: #{gcn_only_nfeat_mean_msg.3} parent=1 // pred_region
      %s140 = ssub.s32 128, 128
      %141 = vsyncadd [#allocation3], %s140
      %s143 = sshll.u32 [#allocation2], 4
      %s144 = int_to_ptr.vmem [resolvable:$true] %s143
      %146 = dma.vmem_to_hbm [thread:$0]  %s144, 128, %s3, [#allocation3]
    $region25: #{gcn_only_nfeat_mean_msg.3} parent=1 // pred_fallthru
      _
    // Predicated region
    $region26: #{gcn_only_nfeat_mean_msg.3} parent=1 // pred_check
      _
    $region27: #{gcn_only_nfeat_mean_msg.3} parent=1 // pred_check_branch
      %148 = sbr.rel (0) target = $region29
    $region28: #{gcn_only_nfeat_mean_msg.3} parent=1 // pred_region
      %149 = dma.done [#allocation3], 128
    $region29: #{gcn_only_nfeat_mean_msg.3} parent=1 // pred_fallthru
      _
    %150 = vsyncpa [#allocation3], 1

// kernel: gcn_only_nfeat_mean_msg.2
$region0: #{gcn_only_nfeat_mean_msg.2}
  #allocation0 [shape = 'u32[]', space=smem, size = 0x4, offset = 0x4, fixed_abs, tag = 'smem constant byte address 0x4 - core index']
  #allocation1 [shape = 'u32[144,128]{1,0:T(1,128)}', space=vmem, size = 0x12000, scoped, tag = 'internal scratch']
  %s0 = inlined_call_operand.vmem [shape: f32[128,32], index: 0, kind: input, shape index: {}]
  %s1 = inlined_call_operand.vmem [shape: f32[32,128], index: 1, kind: input, shape index: {}]
  %s2 = inlined_call_operand.vmem [shape: f32[128,128], index: 2, kind: output, shape index: {}]
  %s3 = sld [smem:[#allocation0]]
  $region18: #{gcn_only_nfeat_mean_msg.2} parent=0
    _
  %s5 = ssub.s32 1, %s3
  %s6 = scalar_select 0, %s5, %s3
  // Predicated region
  $region2: #{gcn_only_nfeat_mean_msg.2} parent=0 // pred_check
    _
  $region3: #{gcn_only_nfeat_mean_msg.2} parent=0 // pred_check_branch
    %8 = sbr.rel (0) target = $region5
  $region4: #{gcn_only_nfeat_mean_msg.2} parent=0 // pred_region
    _
  $region5: #{gcn_only_nfeat_mean_msg.2} parent=0 // pred_fallthru
    _
  // Predicated region
  $region6: #{gcn_only_nfeat_mean_msg.2} parent=0 // pred_check
    _
  $region7: #{gcn_only_nfeat_mean_msg.2} parent=0 // pred_check_branch
    %10 = sbr.rel (0) target = $region9
  $region8: #{gcn_only_nfeat_mean_msg.2} parent=0 // pred_region
    _
  $region9: #{gcn_only_nfeat_mean_msg.2} parent=0 // pred_fallthru
    _
  %v11 = vld [vmem:[%s0] sm:$0xff]
  %v12 = vld [vmem:[%s0 + $0x8] sm:$0xff]
  %v13 = vld [vmem:[%s0 + $0x10] sm:$0xff]
  %v14 = vld [vmem:[%s0 + $0x18] sm:$0xff]
  %v15 = vld [vmem:[%s0 + $0x20] sm:$0xff]
  %v16 = vld [vmem:[%s0 + $0x28] sm:$0xff]
  %v17 = vld [vmem:[%s0 + $0x30] sm:$0xff]
  %v18 = vld [vmem:[%s0 + $0x38] sm:$0xff]
  %v19 = vld [vmem:[%s0 + $0x40] sm:$0xff]
  %v20 = vld [vmem:[%s0 + $0x48] sm:$0xff]
  %v21 = vld [vmem:[%s0 + $0x50] sm:$0xff]
  %v22 = vld [vmem:[%s0 + $0x58] sm:$0xff]
  %v23 = vld [vmem:[%s0 + $0x60] sm:$0xff]
  %v24 = vld [vmem:[%s0 + $0x68] sm:$0xff]
  %v25 = vld [vmem:[%s0 + $0x70] sm:$0xff]
  %v26 = vld [vmem:[%s0 + $0x78] sm:$0xff]
  %v27 = vld [vmem:[%s1] sm:$0xff]
  %v28 = vld [vmem:[%s1 + $0x8] sm:$0xff]
  %v29 = vld [vmem:[%s1 + $0x10] sm:$0xff]
  %v30 = vld [vmem:[%s1 + $0x18] sm:$0xff]
  %vm31 = vcmask 261120
  %v33 = vsel %vm31, %v11, 0
  %v36 = vsel %vm31, %v12, 0
  %v39 = vsel %vm31, %v13, 0
  %v42 = vsel %vm31, %v14, 0
  %v45 = vsel %vm31, %v15, 0
  %v48 = vsel %vm31, %v16, 0
  %v51 = vsel %vm31, %v17, 0
  %v54 = vsel %vm31, %v18, 0
  %v57 = vsel %vm31, %v19, 0
  %v60 = vsel %vm31, %v20, 0
  %v63 = vsel %vm31, %v21, 0
  %v66 = vsel %vm31, %v22, 0
  %v69 = vsel %vm31, %v23, 0
  %v72 = vsel %vm31, %v24, 0
  %v75 = vsel %vm31, %v25, 0
  %v78 = vsel %vm31, %v26, 0
  %80 = vmatprep.subr.mxu0 0.0
  %81 = vmatpush1.msra.mxu0 %v27
  %82 = vmatprep.subr.mxu0 0.0
  %83 = vmatpush1.msra.mxu0 %v28
  %84 = vmatprep.subr.mxu0 0.0
  %85 = vmatpush1.msra.mxu0 %v29
  %86 = vmatprep.subr.mxu0 0.0
  %87 = vmatpush1.msra.mxu0 %v30
  %88 = vmatprep.subr.mxu0 0.0
  %89 = vmatpush1.msra.mxu0 0.0
  %90 = vmatprep.subr.mxu0 0.0
  %91 = vmatpush1.msra.mxu0 0.0
  %92 = vmatprep.subr.mxu0 0.0
  %93 = vmatpush1.msra.mxu0 0.0
  %94 = vmatprep.subr.mxu0 0.0
  %95 = vmatpush1.msra.mxu0 0.0
  %96 = vmatprep.subr.mxu0 0.0
  %97 = vmatpush1.msra.mxu0 0.0
  %98 = vmatprep.subr.mxu0 0.0
  %99 = vmatpush1.msra.mxu0 0.0
  %100 = vmatprep.subr.mxu0 0.0
  %101 = vmatpush1.msra.mxu0 0.0
  %102 = vmatprep.subr.mxu0 0.0
  %103 = vmatpush1.msra.mxu0 0.0
  %104 = vmatprep.subr.mxu0 0.0
  %105 = vmatpush1.msra.mxu0 0.0
  %106 = vmatprep.subr.mxu0 0.0
  %107 = vmatpush1.msra.mxu0 0.0
  %108 = vmatprep.subr.mxu0 0.0
  %109 = vmatpush1.msra.mxu0 0.0
  %110 = vmatprep.subr.mxu0 0.0
  %111 = vmatpush1.msra.mxu0 0.0
  %112 = vmatprep.subr.mxu0 0.0
  %113 = vmatpush1.msra.mxu0 0.0
  %114 = vmatprep.subr.mxu0 0.0
  %115 = vmatpush1.msra.mxu0 0.0
  %116 = vmatprep.subr.mxu0 0.0
  %117 = vmatpush1.msra.mxu0 0.0
  %118 = vmatprep.subr.mxu0 0.0
  %119 = vmatpush1.msra.mxu0 0.0
  %120 = vmatprep.subr.mxu0 0.0
  %121 = vmatpush1.msra.mxu0 0.0
  %122 = vmatprep.subr.mxu0 0.0
  %123 = vmatpush1.msra.mxu0 0.0
  %124 = vmatprep.subr.mxu0 0.0
  %125 = vmatpush1.msra.mxu0 0.0
  %126 = vmatprep.subr.mxu0 0.0
  %127 = vmatpush1.msra.mxu0 0.0
  %128 = vmatprep.subr.mxu0 0.0
  %129 = vmatpush1.msra.mxu0 0.0
  %130 = vmatprep.subr.mxu0 0.0
  %131 = vmatpush1.msra.mxu0 0.0
  %132 = vmatprep.subr.mxu0 0.0
  %133 = vmatpush1.msra.mxu0 0.0
  %134 = vmatprep.subr.mxu0 0.0
  %135 = vmatpush1.msra.mxu0 0.0
  %136 = vmatprep.subr.mxu0 0.0
  %137 = vmatpush1.msra.mxu0 0.0
  %138 = vmatprep.subr.mxu0 0.0
  %139 = vmatpush1.msra.mxu0 0.0
  %140 = vmatprep.subr.mxu0 0.0
  %141 = vmatpush1.msra.mxu0 0.0
  %142 = vmatprep.subr.mxu0 0.0
  %143 = vmatpush1.msra.mxu0 0.0
  %144 = vmatprep.mubr.f32.mxu0 0.0
  %145 = vmatmul.mubr.f32.gmra.mrb[0].mxu0 %v33
  %v146 = vpop.f32.mrb[0].mxu0
  %v147 = vadd.f32 0.0, %v146
  %v148 = vpop.f32.mrb[0].mxu0
  %149 = vmatprep.mubr.f32.mxu0 0.0
  %150 = vmatmul.mubr.f32.gmra.mrb[0].mxu0 %v36
  %v151 = vpop.f32.mrb[0].mxu0
  %v152 = vadd.f32 0.0, %v151
  %v153 = vpop.f32.mrb[0].mxu0
  %154 = vmatprep.mubr.f32.mxu0 0.0
  %155 = vmatmul.mubr.f32.gmra.mrb[0].mxu0 %v39
  %v156 = vpop.f32.mrb[0].mxu0
  %v157 = vadd.f32 0.0, %v156
  %v158 = vpop.f32.mrb[0].mxu0
  %159 = vmatprep.mubr.f32.mxu0 0.0
  %160 = vmatmul.mubr.f32.gmra.mrb[0].mxu0 %v42
  %v161 = vpop.f32.mrb[0].mxu0
  %v162 = vadd.f32 0.0, %v161
  %v163 = vpop.f32.mrb[0].mxu0
  %164 = vmatprep.mubr.f32.mxu0 0.0
  %165 = vmatmul.mubr.f32.gmra.mrb[0].mxu0 %v45
  %v166 = vpop.f32.mrb[0].mxu0
  %v167 = vadd.f32 0.0, %v166
  %v168 = vpop.f32.mrb[0].mxu0
  %169 = vmatprep.mubr.f32.mxu0 0.0
  %170 = vmatmul.mubr.f32.gmra.mrb[0].mxu0 %v48
  %v171 = vpop.f32.mrb[0].mxu0
  %v172 = vadd.f32 0.0, %v171
  %v173 = vpop.f32.mrb[0].mxu0
  %174 = vmatprep.mubr.f32.mxu0 0.0
  %175 = vmatmul.mubr.f32.gmra.mrb[0].mxu0 %v51
  %v176 = vpop.f32.mrb[0].mxu0
  %v177 = vadd.f32 0.0, %v176
  %v178 = vpop.f32.mrb[0].mxu0
  %179 = vmatprep.mubr.f32.mxu0 0.0
  %180 = vmatmul.mubr.f32.gmra.mrb[0].mxu0 %v54
  %v181 = vpop.f32.mrb[0].mxu0
  %v182 = vadd.f32 0.0, %v181
  %v183 = vpop.f32.mrb[0].mxu0
  %184 = vmatprep.mubr.f32.mxu0 0.0
  %185 = vmatmul.mubr.f32.gmra.mrb[0].mxu0 %v57
  %v186 = vpop.f32.mrb[0].mxu0
  %v187 = vadd.f32 0.0, %v186
  %v188 = vpop.f32.mrb[0].mxu0
  %189 = vmatprep.mubr.f32.mxu0 0.0
  %190 = vmatmul.mubr.f32.gmra.mrb[0].mxu0 %v60
  %v191 = vpop.f32.mrb[0].mxu0
  %v192 = vadd.f32 0.0, %v191
  %v193 = vpop.f32.mrb[0].mxu0
  %194 = vmatprep.mubr.f32.mxu0 0.0
  %195 = vmatmul.mubr.f32.gmra.mrb[0].mxu0 %v63
  %v196 = vpop.f32.mrb[0].mxu0
  %v197 = vadd.f32 0.0, %v196
  %v198 = vpop.f32.mrb[0].mxu0
  %199 = vmatprep.mubr.f32.mxu0 0.0
  %200 = vmatmul.mubr.f32.gmra.mrb[0].mxu0 %v66
  %v201 = vpop.f32.mrb[0].mxu0
  %v202 = vadd.f32 0.0, %v201
  %v203 = vpop.f32.mrb[0].mxu0
  %204 = vmatprep.mubr.f32.mxu0 0.0
  %205 = vmatmul.mubr.f32.gmra.mrb[0].mxu0 %v69
  %v206 = vpop.f32.mrb[0].mxu0
  %v207 = vadd.f32 0.0, %v206
  %v208 = vpop.f32.mrb[0].mxu0
  %209 = vmatprep.mubr.f32.mxu0 0.0
  %210 = vmatmul.mubr.f32.gmra.mrb[0].mxu0 %v72
  %v211 = vpop.f32.mrb[0].mxu0
  %v212 = vadd.f32 0.0, %v211
  %v213 = vpop.f32.mrb[0].mxu0
  %214 = vmatprep.mubr.f32.mxu0 0.0
  %215 = vmatmul.mubr.f32.gmra.mrb[0].mxu0 %v75
  %v216 = vpop.f32.mrb[0].mxu0
  %v217 = vadd.f32 0.0, %v216
  %v218 = vpop.f32.mrb[0].mxu0
  %219 = vmatprep.mubr.f32.mxu0 0.0
  %220 = vmatmul.mubr.f32.gmra.mrb[0].mxu0 %v78
  %v221 = vpop.f32.mrb[0].mxu0
  %v222 = vadd.f32 0.0, %v221
  %v223 = vpop.f32.mrb[0].mxu0
  %224 = vdwg.mxu0
  %v225 = vlaneseq
  %v226 = vand.u32 %v225, 127
  %vm227 = vcmp.eq.s32.totalorder %v226, 16
  %v228 = vsel %vm227, 1.0, %v147
  %v229 = vsel %vm227, 1.0, %v152
  %v230 = vsel %vm227, 1.0, %v157
  %v231 = vsel %vm227, 1.0, %v162
  %v232 = vsel %vm227, 1.0, %v167
  %v233 = vsel %vm227, 1.0, %v172
  %v234 = vsel %vm227, 1.0, %v177
  %v235 = vsel %vm227, 1.0, %v182
  %v236 = vsel %vm227, 1.0, %v187
  %v237 = vsel %vm227, 1.0, %v192
  %v238 = vsel %vm227, 1.0, %v197
  %v239 = vsel %vm227, 1.0, %v202
  %v240 = vsel %vm227, 1.0, %v207
  %v241 = vsel %vm227, 1.0, %v212
  %v242 = vsel %vm227, 1.0, %v217
  %v243 = vsel %vm227, 1.0, %v222
  %244 = vst [vmem:[%s2] sm:$0xff] %v228
  %245 = vst [vmem:[%s2 + $0x8] sm:$0xff] %v229
  %246 = vst [vmem:[%s2 + $0x10] sm:$0xff] %v230
  %247 = vst [vmem:[%s2 + $0x18] sm:$0xff] %v231
  %248 = vst [vmem:[%s2 + $0x20] sm:$0xff] %v232
  %249 = vst [vmem:[%s2 + $0x28] sm:$0xff] %v233
  %250 = vst [vmem:[%s2 + $0x30] sm:$0xff] %v234
  %251 = vst [vmem:[%s2 + $0x38] sm:$0xff] %v235
  %252 = vst [vmem:[%s2 + $0x40] sm:$0xff] %v236
  %253 = vst [vmem:[%s2 + $0x48] sm:$0xff] %v237
  %254 = vst [vmem:[%s2 + $0x50] sm:$0xff] %v238
  %255 = vst [vmem:[%s2 + $0x58] sm:$0xff] %v239
  %256 = vst [vmem:[%s2 + $0x60] sm:$0xff] %v240
  %257 = vst [vmem:[%s2 + $0x68] sm:$0xff] %v241
  %258 = vst [vmem:[%s2 + $0x70] sm:$0xff] %v242
  %259 = vst [vmem:[%s2 + $0x78] sm:$0xff] %v243
  // Predicated region
  $region10: #{gcn_only_nfeat_mean_msg.2} parent=0 // pred_check
    _
  $region11: #{gcn_only_nfeat_mean_msg.2} parent=0 // pred_check_branch
    %261 = sbr.rel (0) target = $region13
  $region12: #{gcn_only_nfeat_mean_msg.2} parent=0 // pred_region
    _
  $region13: #{gcn_only_nfeat_mean_msg.2} parent=0 // pred_fallthru
    _
  // Predicated region
  $region14: #{gcn_only_nfeat_mean_msg.2} parent=0 // pred_check
    _
  $region15: #{gcn_only_nfeat_mean_msg.2} parent=0 // pred_check_branch
    %263 = sbr.rel (0) target = $region17
  $region16: #{gcn_only_nfeat_mean_msg.2} parent=0 // pred_region
    _
  $region17: #{gcn_only_nfeat_mean_msg.2} parent=0 // pred_fallthru
    _

</llo_original>
